<compile_context>
chip_gen: v7x
topology: tpu7x:2x2x1
jax: 0.10.0
libtpu: 0.0.40
codegen_flags: <defaults>
</compile_context>

<pallas_src>
import jax
import jax.numpy as jnp
from jax.experimental import pallas as pl
from jax.experimental.pallas import tpu as pltpu

NEG_SLOPE = 0.01   # PyTorch LeakyReLU default


def _leaky(z):
    return jnp.where(z >= 0, z, NEG_SLOPE * z)


def _round_up(v, m):
    return ((v + m - 1) // m) * m


def make_vfl_kernel(compute_dtype):
    """Kernel factory: `compute_dtype` is the MXU operand dtype (accumulation is f32)."""

    def vfl_kernel(x1_ref, x2_ref, wb1_ref, wb2_ref, bb_ref,
                   w1_ref, b1_ref, w2_ref, b2_ref, w3_ref, b3_ref, out_ref):
        # In-kernel operand cast (VPU op, hides under the MXU); inputs arrive as f32.
        x1 = x1_ref[...].astype(compute_dtype)
        x2 = x2_ref[...].astype(compute_dtype)

        # ----- fused bottom models -----
        # Wide zero-padded bottom weights: x1 @ [Wb1 | 0] + x2 @ [0 | Wb2] directly
        # produces the "concatenated" hidden vector -> no jnp.concatenate, no XLU
        # lane shuffles. Bias add + activation stay in f32.
        z = (jnp.dot(x1, wb1_ref[...], preferred_element_type=jnp.float32)
             + jnp.dot(x2, wb2_ref[...], preferred_element_type=jnp.float32)
             + bb_ref[...])
        h = _leaky(z)

        # ----- top model -----
        a1 = _leaky(jnp.dot(h.astype(compute_dtype), w1_ref[...],
                            preferred_element_type=jnp.float32) + b1_ref[...])
        a2 = _leaky(jnp.dot(a1.astype(compute_dtype), w2_ref[...],
                            preferred_element_type=jnp.float32) + b2_ref[...])
        a3 = _leaky(jnp.dot(a2.astype(compute_dtype), w3_ref[...],
                            preferred_element_type=jnp.float32) + b3_ref[...])

        # Dropout in eval mode is identity. Narrow (n_out=2) lane-masked store:
        # fixed per-tile cost, no padded HBM writeback.
        out_ref[...] = a3.astype(out_ref.dtype)

    return vfl_kernel


def pack_params(params, compute_dtype=jnp.bfloat16):
    """Host-side parameter packing. Call once and reuse across forward calls."""
    (wb1, bb1, wb2, bb2, w1, b1, w2, b2, w3, b3) = params
    feat1, lo1 = wb1.shape
    feat2, lo2 = wb2.shape
    h_bot = lo1 + lo2

    # Wide zero-padded bottom weights (replaces in-kernel concat of bottom outputs).
    wb1w = jnp.zeros((feat1, h_bot), jnp.float32).at[:, :lo1].set(wb1)
    wb2w = jnp.zeros((feat2, h_bot), jnp.float32).at[:, lo1:].set(wb2)
    bb = jnp.concatenate([bb1, bb2], axis=1)

    # MXU operand dtype for weights; biases remain f32 (added post-accumulation).
    return (wb1w.astype(compute_dtype), wb2w.astype(compute_dtype), bb,
            w1.astype(compute_dtype), b1,
            w2.astype(compute_dtype), b2,
            w3.astype(compute_dtype), b3)


def vfl_forward(x1, x2, params, *, compute_dtype=jnp.bfloat16, tile_b=None,
                packed=None):
    if packed is None:
        packed = pack_params(params, compute_dtype)
    (wb1w, wb2w, bb, w1k, b1, w2k, b2, w3k, b3) = packed

    batch = x1.shape[0]
    feat1, feat2 = x1.shape[1], x2.shape[1]
    h_bot = wb1w.shape[1]
    n_out = w3k.shape[1]

    # ---------- batch tiling ----------
    if tile_b is None:
        if batch <= 1024:
            tile_b = max(8, _round_up(batch, 8))            # single tile
        else:
            # >=2 tiles so "parallel" shards across v7x's two TensorCores;
            # cap at 2048 rows (VMEM-safe under the 32 MiB scoped limit).
            tile_b = min(2048, _round_up((batch + 1) // 2, 8))
    grid_b = pl.cdiv(batch, tile_b)
    bp = grid_b * tile_b

    x1p = x1.astype(jnp.float32)
    x2p = x2.astype(jnp.float32)
    if bp != batch:
        x1p = jnp.pad(x1p, ((0, bp - batch), (0, 0)))
        x2p = jnp.pad(x2p, ((0, bp - batch), (0, 0)))

    def resident(a):
        # Full-array block, same block index every grid step -> stays in VMEM.
        return pl.BlockSpec(a.shape, lambda i: (0, 0))

    in_specs = [
        pl.BlockSpec((tile_b, feat1), lambda i: (i, 0)),     # x1 tile (pipelined)
        pl.BlockSpec((tile_b, feat2), lambda i: (i, 0)),     # x2 tile (pipelined)
        resident(wb1w), resident(wb2w), resident(bb),
        resident(w1k), resident(b1),
        resident(w2k), resident(b2),
        resident(w3k), resident(b3),
    ]
    # Narrow output block: last dim equals the full array dim (legal), so no padding.
    out_spec = pl.BlockSpec((tile_b, n_out), lambda i: (i, 0))

    flops = 2 * bp * (feat1 * h_bot + feat2 * h_bot
                      + h_bot * 128 + 128 * 256 + 256 * n_out)
    bytes_accessed = (
        (x1p.size + x2p.size) * 4
        + sum(a.size * a.dtype.itemsize
              for a in (wb1w, wb2w, bb, w1k, b1, w2k, b2, w3k, b3))
        + bp * n_out * 4
    )

    out = pl.pallas_call(
        make_vfl_kernel(compute_dtype),
        out_shape=jax.ShapeDtypeStruct((bp, n_out), jnp.float32),
        grid=(grid_b,),
        in_specs=in_specs,
        out_specs=out_spec,
        compiler_params=pltpu.CompilerParams(
            dimension_semantics=("parallel",),   # batch tiles are independent
            vmem_limit_bytes=32 << 20,           # ample for tile_b<=2048, safe on v7x
        ),
        cost_estimate=pl.CostEstimate(
            flops=flops, transcendentals=0, bytes_accessed=bytes_accessed),
    )(x1p, x2p, wb1w, wb2w, bb, w1k, b1, w2k, b2, w3k, b3)

    return out[:batch, :]


def init_params(key, feat1, feat2, local_out1, local_out2):
    """Deterministic synthetic parameter init (uniform, PyTorch-Linear style bound)."""
    def linear(k, fan_in, fan_out):
        k1, k2 = jax.random.split(k)
        bound = 1.0 / jnp.sqrt(jnp.float32(fan_in))
        w = jax.random.uniform(k1, (fan_in, fan_out), jnp.float32, -bound, bound)
        b = jax.random.uniform(k2, (1, fan_out), jnp.float32, -bound, bound)
        return w, b

    in_size = local_out1 + local_out2
    keys = jax.random.split(key, 5)
    wb1, bb1 = linear(keys[0], feat1, local_out1)        # bottom model 0
    wb2, bb2 = linear(keys[1], feat2, local_out2)        # bottom model 1
    w1, b1 = linear(keys[2], in_size, 128)               # top fc1
    w2, b2 = linear(keys[3], 128, 256)                   # top fc2
    w3, b3 = linear(keys[4], 256, 2)                     # top fc3
    return (wb1, bb1, wb2, bb2, w1, b1, w2, b2, w3, b3)


def reference_forward(x1, x2, params):
    """Pure-JAX reference (un-fused path) for correctness checking."""
    (wb1, bb1, wb2, bb2, w1, b1, w2, b2, w3, b3) = params
    h1 = _leaky(x1 @ wb1 + bb1)
    h2 = _leaky(x2 @ wb2 + bb2)
    h = jnp.concatenate([h1, h2], axis=1)
    a1 = _leaky(h @ w1 + b1)
    a2 = _leaky(a1 @ w2 + b2)
    a3 = _leaky(a2 @ w3 + b3)
    return a3


if __name__ == "__main__":
    # Small shapes: 2 clients, batch=8, 16 raw features each, local_out_dim=32 each.
    batch = 8
    feat1, feat2 = 16, 16
    local_out1, local_out2 = 32, 32

    key = jax.random.PRNGKey(0)
    kx1, kx2, kp = jax.random.split(key, 3)
    x1 = jax.random.normal(kx1, (batch, feat1), jnp.float32)
    x2 = jax.random.normal(kx2, (batch, feat2), jnp.float32)
    params = init_params(kp, feat1, feat2, local_out1, local_out2)

    ref = reference_forward(x1, x2, params)

    # f32-operand path: must match the reference tightly (structure correctness).
    out_f32 = jax.block_until_ready(
        vfl_forward(x1, x2, params, compute_dtype=jnp.float32))
    assert out_f32.shape == (batch, 2), out_f32.shape
    assert jnp.allclose(out_f32, ref, atol=1e-5, rtol=1e-5), "f32 mismatch vs reference"

    # bf16-operand path (default, MXU-friendly): loose tolerance vs f32 reference.
    packed = pack_params(params)                       # hoisted packing, reusable
    out_bf16 = jax.block_until_ready(vfl_forward(x1, x2, params, packed=packed))
    assert out_bf16.shape == (batch, 2), out_bf16.shape
    assert jnp.allclose(out_bf16, ref, atol=2e-2, rtol=2e-1), "bf16 mismatch vs reference"

    print("KERNEL_OK")
</pallas_src>

<mosaic_0001>
module attributes {stable_mosaic.version = 11 : i64} {
  func.func @vfl_kernel(%arg0: i32, %arg1: memref<8x16xf32, #tpu.memory_space<vmem>>, %arg2: memref<8x16xf32, #tpu.memory_space<vmem>>, %arg3: memref<16x64xf32, #tpu.memory_space<vmem>>, %arg4: memref<16x64xf32, #tpu.memory_space<vmem>>, %arg5: memref<1x64xf32, #tpu.memory_space<vmem>>, %arg6: memref<64x128xf32, #tpu.memory_space<vmem>>, %arg7: memref<1x128xf32, #tpu.memory_space<vmem>>, %arg8: memref<128x256xf32, #tpu.memory_space<vmem>>, %arg9: memref<1x256xf32, #tpu.memory_space<vmem>>, %arg10: memref<256x2xf32, #tpu.memory_space<vmem>>, %arg11: memref<1x2xf32, #tpu.memory_space<vmem>>, %arg12: memref<8x2xf32, #tpu.memory_space<vmem>>) attributes {dimension_semantics = [#tpu.dimension_semantics<parallel>], iteration_bounds = array<i64: 1>, scalar_prefetch = 0 : i64, scratch_operands = 0 : i64, tpu.core_type = #tpu.core_type<tc>, window_params = [{transform_indices = @transform_0, window_bounds = array<i64: 8, 16>}, {transform_indices = @transform_1, window_bounds = array<i64: 8, 16>}, {pipeline_mode = #tpu.pipeline_mode<synchronous>, transform_indices = @transform_2, window_bounds = array<i64: 16, 64>}, {pipeline_mode = #tpu.pipeline_mode<synchronous>, transform_indices = @transform_3, window_bounds = array<i64: 16, 64>}, {pipeline_mode = #tpu.pipeline_mode<synchronous>, transform_indices = @transform_4, window_bounds = array<i64: 1, 64>}, {pipeline_mode = #tpu.pipeline_mode<synchronous>, transform_indices = @transform_5, window_bounds = array<i64: 64, 128>}, {pipeline_mode = #tpu.pipeline_mode<synchronous>, transform_indices = @transform_6, window_bounds = array<i64: 1, 128>}, {pipeline_mode = #tpu.pipeline_mode<synchronous>, transform_indices = @transform_7, window_bounds = array<i64: 128, 256>}, {pipeline_mode = #tpu.pipeline_mode<synchronous>, transform_indices = @transform_8, window_bounds = array<i64: 1, 256>}, {pipeline_mode = #tpu.pipeline_mode<synchronous>, transform_indices = @transform_9, window_bounds = array<i64: 256, 2>}, {pipeline_mode = #tpu.pipeline_mode<synchronous>, transform_indices = @transform_10, window_bounds = array<i64: 1, 2>}, {transform_indices = @transform_11, window_bounds = array<i64: 8, 2>}]} {
    %c0 = arith.constant 0 : index
    %c0_0 = arith.constant 0 : index
    %0 = vector.load %arg1[%c0, %c0_0] : memref<8x16xf32, #tpu.memory_space<vmem>>, vector<8x16xf32>
    %c0_1 = arith.constant 0 : index
    %c0_2 = arith.constant 0 : index
    %1 = vector.load %arg2[%c0_1, %c0_2] : memref<8x16xf32, #tpu.memory_space<vmem>>, vector<8x16xf32>
    %c0_3 = arith.constant 0 : index
    %c0_4 = arith.constant 0 : index
    %2 = vector.load %arg3[%c0_3, %c0_4] : memref<16x64xf32, #tpu.memory_space<vmem>>, vector<16x64xf32>
    %cst = arith.constant dense<0.000000e+00> : vector<8x64xf32>
    %3 = tpu.matmul %0, %2, %cst {dimension_numbers = #tpu.dot_dimension_numbers<[1], [0], [0], [1], [0, 0, 1, 1], [], []>} : vector<8x16xf32>, vector<16x64xf32>, vector<8x64xf32> -> vector<8x64xf32>
    %c0_5 = arith.constant 0 : index
    %c0_6 = arith.constant 0 : index
    %4 = vector.load %arg4[%c0_5, %c0_6] : memref<16x64xf32, #tpu.memory_space<vmem>>, vector<16x64xf32>
    %cst_7 = arith.constant dense<0.000000e+00> : vector<8x64xf32>
    %5 = tpu.matmul %1, %4, %cst_7 {dimension_numbers = #tpu.dot_dimension_numbers<[1], [0], [0], [1], [0, 0, 1, 1], [], []>} : vector<8x16xf32>, vector<16x64xf32>, vector<8x64xf32> -> vector<8x64xf32>
    %6 = arith.addf %3, %5 : vector<8x64xf32>
    %c0_8 = arith.constant 0 : index
    %c0_9 = arith.constant 0 : index
    %7 = vector.load %arg5[%c0_8, %c0_9] : memref<1x64xf32, #tpu.memory_space<vmem>>, vector<1x64xf32>
    %8 = vector.broadcast %7 : vector<1x64xf32> to vector<8x64xf32>
    %9 = arith.addf %6, %8 : vector<8x64xf32>
    %cst_10 = arith.constant 0.000000e+00 : f32
    %10 = vector.broadcast %cst_10 : f32 to vector<8x64xf32>
    %11 = arith.cmpf oge, %9, %10 : vector<8x64xf32>
    %cst_11 = arith.constant 0.00999999977 : f32
    %12 = vector.broadcast %cst_11 : f32 to vector<8x64xf32>
    %13 = arith.mulf %12, %9 : vector<8x64xf32>
    %14 = arith.select %11, %9, %13 : vector<8x64xi1>, vector<8x64xf32>
    %c0_12 = arith.constant 0 : index
    %c0_13 = arith.constant 0 : index
    %15 = vector.load %arg6[%c0_12, %c0_13] : memref<64x128xf32, #tpu.memory_space<vmem>>, vector<64x128xf32>
    %cst_14 = arith.constant dense<0.000000e+00> : vector<8x128xf32>
    %16 = tpu.matmul %14, %15, %cst_14 {dimension_numbers = #tpu.dot_dimension_numbers<[1], [0], [0], [1], [0, 0, 1, 1], [], []>} : vector<8x64xf32>, vector<64x128xf32>, vector<8x128xf32> -> vector<8x128xf32>
    %c0_15 = arith.constant 0 : index
    %c0_16 = arith.constant 0 : index
    %17 = vector.load %arg7[%c0_15, %c0_16] : memref<1x128xf32, #tpu.memory_space<vmem>>, vector<1x128xf32>
    %18 = vector.broadcast %17 : vector<1x128xf32> to vector<8x128xf32>
    %19 = arith.addf %16, %18 : vector<8x128xf32>
    %cst_17 = arith.constant 0.000000e+00 : f32
    %20 = vector.broadcast %cst_17 : f32 to vector<8x128xf32>
    %21 = arith.cmpf oge, %19, %20 : vector<8x128xf32>
    %cst_18 = arith.constant 0.00999999977 : f32
    %22 = vector.broadcast %cst_18 : f32 to vector<8x128xf32>
    %23 = arith.mulf %22, %19 : vector<8x128xf32>
    %24 = arith.select %21, %19, %23 : vector<8x128xi1>, vector<8x128xf32>
    %c0_19 = arith.constant 0 : index
    %c0_20 = arith.constant 0 : index
    %25 = vector.load %arg8[%c0_19, %c0_20] : memref<128x256xf32, #tpu.memory_space<vmem>>, vector<128x256xf32>
    %cst_21 = arith.constant dense<0.000000e+00> : vector<8x256xf32>
    %26 = tpu.matmul %24, %25, %cst_21 {dimension_numbers = #tpu.dot_dimension_numbers<[1], [0], [0], [1], [0, 0, 1, 1], [], []>} : vector<8x128xf32>, vector<128x256xf32>, vector<8x256xf32> -> vector<8x256xf32>
    %c0_22 = arith.constant 0 : index
    %c0_23 = arith.constant 0 : index
    %27 = vector.load %arg9[%c0_22, %c0_23] : memref<1x256xf32, #tpu.memory_space<vmem>>, vector<1x256xf32>
    %28 = vector.broadcast %27 : vector<1x256xf32> to vector<8x256xf32>
    %29 = arith.addf %26, %28 : vector<8x256xf32>
    %cst_24 = arith.constant 0.000000e+00 : f32
    %30 = vector.broadcast %cst_24 : f32 to vector<8x256xf32>
    %31 = arith.cmpf oge, %29, %30 : vector<8x256xf32>
    %cst_25 = arith.constant 0.00999999977 : f32
    %32 = vector.broadcast %cst_25 : f32 to vector<8x256xf32>
    %33 = arith.mulf %32, %29 : vector<8x256xf32>
    %34 = arith.select %31, %29, %33 : vector<8x256xi1>, vector<8x256xf32>
    %c0_26 = arith.constant 0 : index
    %c0_27 = arith.constant 0 : index
    %35 = vector.load %arg10[%c0_26, %c0_27] : memref<256x2xf32, #tpu.memory_space<vmem>>, vector<256x2xf32>
    %cst_28 = arith.constant dense<0.000000e+00> : vector<8x2xf32>
    %36 = tpu.matmul %34, %35, %cst_28 {dimension_numbers = #tpu.dot_dimension_numbers<[1], [0], [0], [1], [0, 0, 1, 1], [], []>} : vector<8x256xf32>, vector<256x2xf32>, vector<8x2xf32> -> vector<8x2xf32>
    %c0_29 = arith.constant 0 : index
    %c0_30 = arith.constant 0 : index
    %37 = vector.load %arg11[%c0_29, %c0_30] : memref<1x2xf32, #tpu.memory_space<vmem>>, vector<1x2xf32>
    %38 = vector.broadcast %37 : vector<1x2xf32> to vector<8x2xf32>
    %39 = arith.addf %36, %38 : vector<8x2xf32>
    %cst_31 = arith.constant 0.000000e+00 : f32
    %40 = vector.broadcast %cst_31 : f32 to vector<8x2xf32>
    %41 = arith.cmpf oge, %39, %40 : vector<8x2xf32>
    %cst_32 = arith.constant 0.00999999977 : f32
    %42 = vector.broadcast %cst_32 : f32 to vector<8x2xf32>
    %43 = arith.mulf %42, %39 : vector<8x2xf32>
    %44 = arith.select %41, %39, %43 : vector<8x2xi1>, vector<8x2xf32>
    %c0_33 = arith.constant 0 : index
    %c0_34 = arith.constant 0 : index
    %45 = vector.load %arg12[%c0_33, %c0_34] : memref<8x2xf32, #tpu.memory_space<vmem>>, vector<8x2xf32>
    tpu.vector_store %arg12[%c0_33, %c0_34], %44 {strides = array<i32>} : memref<8x2xf32, #tpu.memory_space<vmem>>, vector<8x2xf32>,
    return
  }
  func.func @transform_0(%arg0: i32) -> (i32, i32) {
    %c0_i32 = arith.constant 0 : i32
    %c0_i32_0 = arith.constant 0 : i32
    return %arg0, %c0_i32 : i32, i32
  }
  func.func @transform_1(%arg0: i32) -> (i32, i32) {
    %c0_i32 = arith.constant 0 : i32
    %c0_i32_0 = arith.constant 0 : i32
    return %arg0, %c0_i32 : i32, i32
  }
  func.func @transform_2(%arg0: i32) -> (i32, i32) {
    %c0_i32 = arith.constant 0 : i32
    %c0_i32_0 = arith.constant 0 : i32
    %c0_i32_1 = arith.constant 0 : i32
    return %c0_i32, %c0_i32_0 : i32, i32
  }
  func.func @transform_3(%arg0: i32) -> (i32, i32) {
    %c0_i32 = arith.constant 0 : i32
    %c0_i32_0 = arith.constant 0 : i32
    %c0_i32_1 = arith.constant 0 : i32
    return %c0_i32, %c0_i32_0 : i32, i32
  }
  func.func @transform_4(%arg0: i32) -> (i32, i32) {
    %c0_i32 = arith.constant 0 : i32
    %c0_i32_0 = arith.constant 0 : i32
    %c0_i32_1 = arith.constant 0 : i32
    return %c0_i32, %c0_i32_0 : i32, i32
  }
  func.func @transform_5(%arg0: i32) -> (i32, i32) {
    %c0_i32 = arith.constant 0 : i32
    %c0_i32_0 = arith.constant 0 : i32
    %c0_i32_1 = arith.constant 0 : i32
    return %c0_i32, %c0_i32_0 : i32, i32
  }
  func.func @transform_6(%arg0: i32) -> (i32, i32) {
    %c0_i32 = arith.constant 0 : i32
    %c0_i32_0 = arith.constant 0 : i32
    %c0_i32_1 = arith.constant 0 : i32
    return %c0_i32, %c0_i32_0 : i32, i32
  }
  func.func @transform_7(%arg0: i32) -> (i32, i32) {
    %c0_i32 = arith.constant 0 : i32
    %c0_i32_0 = arith.constant 0 : i32
    %c0_i32_1 = arith.constant 0 : i32
    return %c0_i32, %c0_i32_0 : i32, i32
  }
  func.func @transform_8(%arg0: i32) -> (i32, i32) {
    %c0_i32 = arith.constant 0 : i32
    %c0_i32_0 = arith.constant 0 : i32
    %c0_i32_1 = arith.constant 0 : i32
    return %c0_i32, %c0_i32_0 : i32, i32
  }
  func.func @transform_9(%arg0: i32) -> (i32, i32) {
    %c0_i32 = arith.constant 0 : i32
    %c0_i32_0 = arith.constant 0 : i32
    %c0_i32_1 = arith.constant 0 : i32
    return %c0_i32, %c0_i32_0 : i32, i32
  }
  func.func @transform_10(%arg0: i32) -> (i32, i32) {
    %c0_i32 = arith.constant 0 : i32
    %c0_i32_0 = arith.constant 0 : i32
    %c0_i32_1 = arith.constant 0 : i32
    return %c0_i32, %c0_i32_0 : i32, i32
  }
  func.func @transform_11(%arg0: i32) -> (i32, i32) {
    %c0_i32 = arith.constant 0 : i32
    %c0_i32_0 = arith.constant 0 : i32
    return %arg0, %c0_i32 : i32, i32
  }
}

</mosaic_0001>

<llo_original>
// kernel: tpu_custom_call.1
$region0: #{tpu_custom_call.1}
  #allocation0 [shape = 'u32[]', space=smem, size = 0x4, offset = 0x4, fixed_abs, tag = 'smem constant byte address 0x4 - core index']
  #allocation1 [shape = 'u32[144,128]{1,0:T(1,128)}', space=vmem, size = 0x12000, scoped, tag = 'internal scratch']
  %s0 = inlined_call_operand.vmem [shape: f32[8,16], index: 0, kind: input, shape index: {}]
  %s1 = inlined_call_operand.hbm [shape: f32[8,16], index: 1, kind: input, shape index: {}]
  %s2 = inlined_call_operand.vmem [shape: f32[16,64], index: 2, kind: input, shape index: {}]
  %s3 = inlined_call_operand.hbm [shape: f32[16,64], index: 3, kind: input, shape index: {}]
  %s4 = inlined_call_operand.vmem [shape: f32[1,64], index: 4, kind: input, shape index: {}]
  %s5 = inlined_call_operand.hbm [shape: f32[64,128], index: 5, kind: input, shape index: {}]
  %s6 = inlined_call_operand.vmem [shape: f32[1,128], index: 6, kind: input, shape index: {}]
  %s7 = inlined_call_operand.vmem [shape: f32[128,256], index: 7, kind: input, shape index: {}]
  %s8 = inlined_call_operand.vmem [shape: f32[1,256], index: 8, kind: input, shape index: {}]
  %s9 = inlined_call_operand.vmem [shape: f32[256,2], index: 9, kind: input, shape index: {}]
  %s10 = inlined_call_operand.vmem [shape: f32[1,2], index: 10, kind: input, shape index: {}]
  %s11 = inlined_call_operand.vmem [shape: f32[8,2], index: 11, kind: output, shape index: {}]
  %s12 = sld [smem:[#allocation0]]
  $region66: #{tpu_custom_call.1} parent=0
    _
  %s14 = ssub.s32 1, %s12
  %s15 = scalar_select 0, %s14, %s12
  $region1: #{tpu_custom_call.1} parent=0
    #allocation2 [shape = 'u8[4096]{0}', space=vmem, size = 0x1000, scoped, tag = 'input window, operand 1, single buffered']
    #allocation3 [shape = 's32[1]{0}', space=sflag, size = 0x4, scoped, tag = 'scoped memory for tpu_custom_call.1']
    #allocation4 [shape = 'u8[8192]{0}', space=vmem, size = 0x2000, scoped, tag = 'input window, operand 3, single buffered']
    #allocation5 [shape = 's32[1]{0}', space=sflag, size = 0x4, scoped, tag = 'scoped memory for tpu_custom_call.1']
    #allocation6 [shape = 'u8[32768]{0}', space=vmem, size = 0x8000, scoped, tag = 'input window, operand 5, single buffered']
    %16 = vsyncpa [#allocation3], 0
    %17 = vsyncpa [#allocation5], 0
    // Predicated region
    $region2: #{tpu_custom_call.1} parent=1 // pred_check
      _
    $region3: #{tpu_custom_call.1} parent=1 // pred_check_branch
      %19 = sbr.rel (0) target = $region5
    $region4: #{tpu_custom_call.1} parent=1 // pred_region
      _
    $region5: #{tpu_custom_call.1} parent=1 // pred_fallthru
      _
    // Predicated region
    $region6: #{tpu_custom_call.1} parent=1 // pred_check
      _
    $region7: #{tpu_custom_call.1} parent=1 // pred_check_branch
      %21 = sbr.rel (0) target = $region9
    $region8: #{tpu_custom_call.1} parent=1 // pred_region
      %s23 = ssub.s32 128, 128
      %24 = vsyncadd [#allocation3], %s23
      %s26 = sshll.u32 [#allocation2], 4
      %s27 = int_to_ptr.vmem [resolvable:$true] %s26
      %29 = dma.hbm_to_vmem [thread:$0]  %s1, 128, %s27, [#allocation3]
    $region9: #{tpu_custom_call.1} parent=1 // pred_fallthru
      _
    // Predicated region
    $region10: #{tpu_custom_call.1} parent=1 // pred_check
      _
    $region11: #{tpu_custom_call.1} parent=1 // pred_check_branch
      %31 = sbr.rel (0) target = $region13
    $region12: #{tpu_custom_call.1} parent=1 // pred_region
      _
    $region13: #{tpu_custom_call.1} parent=1 // pred_fallthru
      _
    // Predicated region
    $region14: #{tpu_custom_call.1} parent=1 // pred_check
      _
    $region15: #{tpu_custom_call.1} parent=1 // pred_check_branch
      %33 = sbr.rel (0) target = $region17
    $region16: #{tpu_custom_call.1} parent=1 // pred_region
      %s35 = ssub.s32 256, 256
      %36 = vsyncadd [#allocation5], %s35
      %s37 = sshll.u32 [#allocation4], 4
      %s38 = int_to_ptr.vmem [resolvable:$true] %s37
      %43 = dma.hbm_to_vmem [thread:$0]  %s3, 256, %s38, [#allocation5], 128, 128, 8
    $region17: #{tpu_custom_call.1} parent=1 // pred_fallthru
      _
    // Predicated region
    $region18: #{tpu_custom_call.1} parent=1 // pred_check
      _
    $region19: #{tpu_custom_call.1} parent=1 // pred_check_branch
      %45 = sbr.rel (0) target = $region21
    $region20: #{tpu_custom_call.1} parent=1 // pred_region
      _
    $region21: #{tpu_custom_call.1} parent=1 // pred_fallthru
      _
    // Predicated region
    $region22: #{tpu_custom_call.1} parent=1 // pred_check
      _
    $region23: #{tpu_custom_call.1} parent=1 // pred_check_branch
      %47 = sbr.rel (0) target = $region25
    $region24: #{tpu_custom_call.1} parent=1 // pred_region
      %s49 = ssub.s32 1024, 1024
      %50 = vsyncadd [#allocation5], %s49
      %s51 = sshll.u32 [#allocation6], 4
      %s52 = int_to_ptr.vmem [resolvable:$true] %s51
      %57 = dma.hbm_to_vmem [thread:$0]  %s5, 1024, %s52, [#allocation5], 128, 128, 8
    $region25: #{tpu_custom_call.1} parent=1 // pred_fallthru
      _
    // Predicated region
    $region26: #{tpu_custom_call.1} parent=1 // pred_check
      _
    $region27: #{tpu_custom_call.1} parent=1 // pred_check_branch
      %59 = sbr.rel (0) target = $region29
    $region28: #{tpu_custom_call.1} parent=1 // pred_region
      _
    $region29: #{tpu_custom_call.1} parent=1 // pred_fallthru
      _
    // Predicated region
    $region30: #{tpu_custom_call.1} parent=1 // pred_check
      _
    $region31: #{tpu_custom_call.1} parent=1 // pred_check_branch
      %61 = sbr.rel (0) target = $region33
    $region32: #{tpu_custom_call.1} parent=1 // pred_region
      _
    $region33: #{tpu_custom_call.1} parent=1 // pred_fallthru
      _
    // Predicated region
    $region34: #{tpu_custom_call.1} parent=1 // pred_check
      _
    $region35: #{tpu_custom_call.1} parent=1 // pred_check_branch
      %63 = sbr.rel (0) target = $region37
    $region36: #{tpu_custom_call.1} parent=1 // pred_region
      _
    $region37: #{tpu_custom_call.1} parent=1 // pred_fallthru
      _
    // Predicated region
    $region38: #{tpu_custom_call.1} parent=1 // pred_check
      _
    $region39: #{tpu_custom_call.1} parent=1 // pred_check_branch
      %65 = sbr.rel (0) target = $region41
    $region40: #{tpu_custom_call.1} parent=1 // pred_region
      _
    $region41: #{tpu_custom_call.1} parent=1 // pred_fallthru
      _
    // Predicated region
    $region42: #{tpu_custom_call.1} parent=1 // pred_check
      _
    $region43: #{tpu_custom_call.1} parent=1 // pred_check_branch
      %67 = sbr.rel (0) target = $region45
    $region44: #{tpu_custom_call.1} parent=1 // pred_region
      _
    $region45: #{tpu_custom_call.1} parent=1 // pred_fallthru
      _
    // Predicated region
    $region46: #{tpu_custom_call.1} parent=1 // pred_check
      _
    $region47: #{tpu_custom_call.1} parent=1 // pred_check_branch
      %69 = sbr.rel (0) target = $region49
    $region48: #{tpu_custom_call.1} parent=1 // pred_region
      %70 = dma.done [#allocation3], 128
    $region49: #{tpu_custom_call.1} parent=1 // pred_fallthru
      _
    // Predicated region
    $region50: #{tpu_custom_call.1} parent=1 // pred_check
      _
    $region51: #{tpu_custom_call.1} parent=1 // pred_check_branch
      %72 = sbr.rel (0) target = $region53
    $region52: #{tpu_custom_call.1} parent=1 // pred_region
      %73 = dma.done [#allocation5], 256
    $region53: #{tpu_custom_call.1} parent=1 // pred_fallthru
      _
    // Predicated region
    $region54: #{tpu_custom_call.1} parent=1 // pred_check
      _
    $region55: #{tpu_custom_call.1} parent=1 // pred_check_branch
      %75 = sbr.rel (0) target = $region57
    $region56: #{tpu_custom_call.1} parent=1 // pred_region
      %76 = dma.done [#allocation5], 1024
    $region57: #{tpu_custom_call.1} parent=1 // pred_fallthru
      _
    %v77 = vld [vmem:[%s0] sm:$0xff]
    %v78 = vld [vmem:[#allocation2] sm:$0xff]
    %v79 = vld [vmem:[%s2] sm:$0xff]
    %v80 = vld [vmem:[%s2 + $0x8] sm:$0xff]
    %v81 = vld [vmem:[#allocation4] sm:$0xff]
    %v82 = vld [vmem:[#allocation4 + $0x8] sm:$0xff]
    %vm83 = vcmask 130048
    %v85 = vsel %vm83, %v78, 0
    %87 = vmatprep.subr.mxu0 0.0
    %88 = vmatpush1.msra.mxu0 %v81
    %89 = vmatprep.subr.mxu0 0.0
    %90 = vmatpush1.msra.mxu0 %v82
    %91 = vmatprep.subr.mxu0 0.0
    %92 = vmatpush1.msra.mxu0 0.0
    %93 = vmatprep.subr.mxu0 0.0
    %94 = vmatpush1.msra.mxu0 0.0
    %95 = vmatprep.subr.mxu0 0.0
    %96 = vmatpush1.msra.mxu0 0.0
    %97 = vmatprep.subr.mxu0 0.0
    %98 = vmatpush1.msra.mxu0 0.0
    %99 = vmatprep.subr.mxu0 0.0
    %100 = vmatpush1.msra.mxu0 0.0
    %101 = vmatprep.subr.mxu0 0.0
    %102 = vmatpush1.msra.mxu0 0.0
    %103 = vmatprep.subr.mxu0 0.0
    %104 = vmatpush1.msra.mxu0 0.0
    %105 = vmatprep.subr.mxu0 0.0
    %106 = vmatpush1.msra.mxu0 0.0
    %107 = vmatprep.subr.mxu0 0.0
    %108 = vmatpush1.msra.mxu0 0.0
    %109 = vmatprep.subr.mxu0 0.0
    %110 = vmatpush1.msra.mxu0 0.0
    %111 = vmatprep.subr.mxu0 0.0
    %112 = vmatpush1.msra.mxu0 0.0
    %113 = vmatprep.subr.mxu0 0.0
    %114 = vmatpush1.msra.mxu0 0.0
    %115 = vmatprep.subr.mxu0 0.0
    %116 = vmatpush1.msra.mxu0 0.0
    %117 = vmatprep.subr.mxu0 0.0
    %118 = vmatpush1.msra.mxu0 0.0
    %119 = vmatprep.subr.mxu0 0.0
    %120 = vmatpush1.msra.mxu0 0.0
    %121 = vmatprep.subr.mxu0 0.0
    %122 = vmatpush1.msra.mxu0 0.0
    %123 = vmatprep.subr.mxu0 0.0
    %124 = vmatpush1.msra.mxu0 0.0
    %125 = vmatprep.subr.mxu0 0.0
    %126 = vmatpush1.msra.mxu0 0.0
    %127 = vmatprep.subr.mxu0 0.0
    %128 = vmatpush1.msra.mxu0 0.0
    %129 = vmatprep.subr.mxu0 0.0
    %130 = vmatpush1.msra.mxu0 0.0
    %131 = vmatprep.subr.mxu0 0.0
    %132 = vmatpush1.msra.mxu0 0.0
    %133 = vmatprep.subr.mxu0 0.0
    %134 = vmatpush1.msra.mxu0 0.0
    %135 = vmatprep.subr.mxu0 0.0
    %136 = vmatpush1.msra.mxu0 0.0
    %137 = vmatprep.subr.mxu0 0.0
    %138 = vmatpush1.msra.mxu0 0.0
    %139 = vmatprep.subr.mxu0 0.0
    %140 = vmatpush1.msra.mxu0 0.0
    %141 = vmatprep.subr.mxu0 0.0
    %142 = vmatpush1.msra.mxu0 0.0
    %143 = vmatprep.subr.mxu0 0.0
    %144 = vmatpush1.msra.mxu0 0.0
    %145 = vmatprep.subr.mxu0 0.0
    %146 = vmatpush1.msra.mxu0 0.0
    %147 = vmatprep.subr.mxu0 0.0
    %148 = vmatpush1.msra.mxu0 0.0
    %149 = vmatprep.subr.mxu0 0.0
    %150 = vmatpush1.msra.mxu0 0.0
    %151 = vmatprep.mubr.f32.mxu0 0.0
    %152 = vmatmul.mubr.f32.gmra.mrb[0].mxu0 %v85
    %v153 = vpop.f32.mrb[0].mxu0
    %v154 = vadd.f32 0.0, %v153
    %v155 = vpop.f32.mrb[0].mxu0
    %156 = vdwg.mxu0
    %v158 = vsel %vm83, %v77, 0
    %160 = vmatprep.subr.mxu0 0.0
    %161 = vmatpush1.msra.mxu0 %v79
    %162 = vmatprep.subr.mxu0 0.0
    %163 = vmatpush1.msra.mxu0 %v80
    %164 = vmatprep.subr.mxu0 0.0
    %165 = vmatpush1.msra.mxu0 0.0
    %166 = vmatprep.subr.mxu0 0.0
    %167 = vmatpush1.msra.mxu0 0.0
    %168 = vmatprep.subr.mxu0 0.0
    %169 = vmatpush1.msra.mxu0 0.0
    %170 = vmatprep.subr.mxu0 0.0
    %171 = vmatpush1.msra.mxu0 0.0
    %172 = vmatprep.subr.mxu0 0.0
    %173 = vmatpush1.msra.mxu0 0.0
    %174 = vmatprep.subr.mxu0 0.0
    %175 = vmatpush1.msra.mxu0 0.0
    %176 = vmatprep.subr.mxu0 0.0
    %177 = vmatpush1.msra.mxu0 0.0
    %178 = vmatprep.subr.mxu0 0.0
    %179 = vmatpush1.msra.mxu0 0.0
    %180 = vmatprep.subr.mxu0 0.0
    %181 = vmatpush1.msra.mxu0 0.0
    %182 = vmatprep.subr.mxu0 0.0
    %183 = vmatpush1.msra.mxu0 0.0
    %184 = vmatprep.subr.mxu0 0.0
    %185 = vmatpush1.msra.mxu0 0.0
    %186 = vmatprep.subr.mxu0 0.0
    %187 = vmatpush1.msra.mxu0 0.0
    %188 = vmatprep.subr.mxu0 0.0
    %189 = vmatpush1.msra.mxu0 0.0
    %190 = vmatprep.subr.mxu0 0.0
    %191 = vmatpush1.msra.mxu0 0.0
    %192 = vmatprep.subr.mxu0 0.0
    %193 = vmatpush1.msra.mxu0 0.0
    %194 = vmatprep.subr.mxu0 0.0
    %195 = vmatpush1.msra.mxu0 0.0
    %196 = vmatprep.subr.mxu0 0.0
    %197 = vmatpush1.msra.mxu0 0.0
    %198 = vmatprep.subr.mxu0 0.0
    %199 = vmatpush1.msra.mxu0 0.0
    %200 = vmatprep.subr.mxu0 0.0
    %201 = vmatpush1.msra.mxu0 0.0
    %202 = vmatprep.subr.mxu0 0.0
    %203 = vmatpush1.msra.mxu0 0.0
    %204 = vmatprep.subr.mxu0 0.0
    %205 = vmatpush1.msra.mxu0 0.0
    %206 = vmatprep.subr.mxu0 0.0
    %207 = vmatpush1.msra.mxu0 0.0
    %208 = vmatprep.subr.mxu0 0.0
    %209 = vmatpush1.msra.mxu0 0.0
    %210 = vmatprep.subr.mxu0 0.0
    %211 = vmatpush1.msra.mxu0 0.0
    %212 = vmatprep.subr.mxu0 0.0
    %213 = vmatpush1.msra.mxu0 0.0
    %214 = vmatprep.subr.mxu0 0.0
    %215 = vmatpush1.msra.mxu0 0.0
    %216 = vmatprep.subr.mxu0 0.0
    %217 = vmatpush1.msra.mxu0 0.0
    %218 = vmatprep.subr.mxu0 0.0
    %219 = vmatpush1.msra.mxu0 0.0
    %220 = vmatprep.subr.mxu0 0.0
    %221 = vmatpush1.msra.mxu0 0.0
    %222 = vmatprep.subr.mxu0 0.0
    %223 = vmatpush1.msra.mxu0 0.0
    %224 = vmatprep.mubr.f32.mxu0 0.0
    %225 = vmatmul.mubr.f32.gmra.mrb[0].mxu0 %v158
    %v226 = vpop.f32.mrb[0].mxu0
    %v227 = vadd.f32 %v154, %v226
    %v228 = vpop.f32.mrb[0].mxu0
    %229 = vdwg.mxu0
    %v230 = vld [vmem:[%s4] sm:$0x1]
    %v232 = vlaneseq
    %v233 = vshrl.u32 %v232, 7
    %v234 = vsub.s32 0, %v233
    %v235 = vrot.slane %v230, %v234
    %v237 = vadd.f32 %v227, %v235
    %vm238 = vcmp.ge.f32.partialorder %v237, 0.0
    %v239 = vmul.f32 %v237, 0.01
    %v240 = vsel %vm238, %v237, %v239
    %v241 = vld [vmem:[#allocation6] sm:$0xff]
    %v242 = vld [vmem:[#allocation6 + $0x8] sm:$0xff]
    %v243 = vld [vmem:[#allocation6 + $0x10] sm:$0xff]
    %v244 = vld [vmem:[#allocation6 + $0x18] sm:$0xff]
    %v245 = vld [vmem:[#allocation6 + $0x20] sm:$0xff]
    %v246 = vld [vmem:[#allocation6 + $0x28] sm:$0xff]
    %v247 = vld [vmem:[#allocation6 + $0x30] sm:$0xff]
    %v248 = vld [vmem:[#allocation6 + $0x38] sm:$0xff]
    %v249 = vld [vmem:[%s6] sm:$0x1]
    %v251 = vlaneseq
    %v252 = vshrl.u32 %v251, 7
    %v253 = vsub.s32 0, %v252
    %v254 = vrot.slane %v249, %v253
    %vm256 = vcmask 523264
    %v258 = vsel %vm256, %v240, 0
    %260 = vmatprep.subr.mxu0 0.0
    %261 = vmatpush1.msra.mxu0 %v241
    %262 = vmatprep.subr.mxu0 0.0
    %263 = vmatpush1.msra.mxu0 %v242
    %264 = vmatprep.subr.mxu0 0.0
    %265 = vmatpush1.msra.mxu0 %v243
    %266 = vmatprep.subr.mxu0 0.0
    %267 = vmatpush1.msra.mxu0 %v244
    %268 = vmatprep.subr.mxu0 0.0
    %269 = vmatpush1.msra.mxu0 %v245
    %270 = vmatprep.subr.mxu0 0.0
    %271 = vmatpush1.msra.mxu0 %v246
    %272 = vmatprep.subr.mxu0 0.0
    %273 = vmatpush1.msra.mxu0 %v247
    %274 = vmatprep.subr.mxu0 0.0
    %275 = vmatpush1.msra.mxu0 %v248
    %276 = vmatprep.subr.mxu0 0.0
    %277 = vmatpush1.msra.mxu0 0.0
    %278 = vmatprep.subr.mxu0 0.0
    %279 = vmatpush1.msra.mxu0 0.0
    %280 = vmatprep.subr.mxu0 0.0
    %281 = vmatpush1.msra.mxu0 0.0
    %282 = vmatprep.subr.mxu0 0.0
    %283 = vmatpush1.msra.mxu0 0.0
    %284 = vmatprep.subr.mxu0 0.0
    %285 = vmatpush1.msra.mxu0 0.0
    %286 = vmatprep.subr.mxu0 0.0
    %287 = vmatpush1.msra.mxu0 0.0
    %288 = vmatprep.subr.mxu0 0.0
    %289 = vmatpush1.msra.mxu0 0.0
    %290 = vmatprep.subr.mxu0 0.0
    %291 = vmatpush1.msra.mxu0 0.0
    %292 = vmatprep.subr.mxu0 0.0
    %293 = vmatpush1.msra.mxu0 0.0
    %294 = vmatprep.subr.mxu0 0.0
    %295 = vmatpush1.msra.mxu0 0.0
    %296 = vmatprep.subr.mxu0 0.0
    %297 = vmatpush1.msra.mxu0 0.0
    %298 = vmatprep.subr.mxu0 0.0
    %299 = vmatpush1.msra.mxu0 0.0
    %300 = vmatprep.subr.mxu0 0.0
    %301 = vmatpush1.msra.mxu0 0.0
    %302 = vmatprep.subr.mxu0 0.0
    %303 = vmatpush1.msra.mxu0 0.0
    %304 = vmatprep.subr.mxu0 0.0
    %305 = vmatpush1.msra.mxu0 0.0
    %306 = vmatprep.subr.mxu0 0.0
    %307 = vmatpush1.msra.mxu0 0.0
    %308 = vmatprep.subr.mxu0 0.0
    %309 = vmatpush1.msra.mxu0 0.0
    %310 = vmatprep.subr.mxu0 0.0
    %311 = vmatpush1.msra.mxu0 0.0
    %312 = vmatprep.subr.mxu0 0.0
    %313 = vmatpush1.msra.mxu0 0.0
    %314 = vmatprep.subr.mxu0 0.0
    %315 = vmatpush1.msra.mxu0 0.0
    %316 = vmatprep.subr.mxu0 0.0
    %317 = vmatpush1.msra.mxu0 0.0
    %318 = vmatprep.subr.mxu0 0.0
    %319 = vmatpush1.msra.mxu0 0.0
    %320 = vmatprep.subr.mxu0 0.0
    %321 = vmatpush1.msra.mxu0 0.0
    %322 = vmatprep.subr.mxu0 0.0
    %323 = vmatpush1.msra.mxu0 0.0
    %324 = vmatprep.mubr.f32.mxu0 0.0
    %325 = vmatmul.mubr.f32.gmra.mrb[0].mxu0 %v258
    %v326 = vpop.f32.mrb[0].mxu0
    %v327 = vadd.f32 %v254, %v326
    %v328 = vpop.f32.mrb[0].mxu0
    %329 = vdwg.mxu0
    %vm330 = vcmp.ge.f32.partialorder %v327, 0.0
    %v331 = vmul.f32 %v327, 0.01
    %v332 = vsel %vm330, %v327, %v331
    %v333 = vld [vmem:[%s7] sm:$0xff]
    %v334 = vld [vmem:[%s7 + $0x8] sm:$0xff]
    %v335 = vld [vmem:[%s7 + $0x10] sm:$0xff]
    %v336 = vld [vmem:[%s7 + $0x18] sm:$0xff]
    %v337 = vld [vmem:[%s7 + $0x20] sm:$0xff]
    %v338 = vld [vmem:[%s7 + $0x28] sm:$0xff]
    %v339 = vld [vmem:[%s7 + $0x30] sm:$0xff]
    %v340 = vld [vmem:[%s7 + $0x38] sm:$0xff]
    %v341 = vld [vmem:[%s7 + $0x40] sm:$0xff]
    %v342 = vld [vmem:[%s7 + $0x48] sm:$0xff]
    %v343 = vld [vmem:[%s7 + $0x50] sm:$0xff]
    %v344 = vld [vmem:[%s7 + $0x58] sm:$0xff]
    %v345 = vld [vmem:[%s7 + $0x60] sm:$0xff]
    %v346 = vld [vmem:[%s7 + $0x68] sm:$0xff]
    %v347 = vld [vmem:[%s7 + $0x70] sm:$0xff]
    %v348 = vld [vmem:[%s7 + $0x78] sm:$0xff]
    %v349 = vld [vmem:[%s7 + $0x80] sm:$0xff]
    %v350 = vld [vmem:[%s7 + $0x88] sm:$0xff]
    %v351 = vld [vmem:[%s7 + $0x90] sm:$0xff]
    %v352 = vld [vmem:[%s7 + $0x98] sm:$0xff]
    %v353 = vld [vmem:[%s7 + $0xa0] sm:$0xff]
    %v354 = vld [vmem:[%s7 + $0xa8] sm:$0xff]
    %v355 = vld [vmem:[%s7 + $0xb0] sm:$0xff]
    %v356 = vld [vmem:[%s7 + $0xb8] sm:$0xff]
    %v357 = vld [vmem:[%s7 + $0xc0] sm:$0xff]
    %v358 = vld [vmem:[%s7 + $0xc8] sm:$0xff]
    %v359 = vld [vmem:[%s7 + $0xd0] sm:$0xff]
    %v360 = vld [vmem:[%s7 + $0xd8] sm:$0xff]
    %v361 = vld [vmem:[%s7 + $0xe0] sm:$0xff]
    %v362 = vld [vmem:[%s7 + $0xe8] sm:$0xff]
    %v363 = vld [vmem:[%s7 + $0xf0] sm:$0xff]
    %v364 = vld [vmem:[%s7 + $0xf8] sm:$0xff]
    %v365 = vld [vmem:[%s8] sm:$0x3]
    %v367 = vlaneseq
    %v368 = vshrl.u32 %v367, 7
    %v369 = vsub.s32 0, %v368
    %v370 = vrot.slane %v365, %v369
    %v371 = vlaneseq
    %v372 = vshrl.u32 %v371, 7
    %v373 = vsub.s32 1, %v372
    %v374 = vrot.slane %v365, %v373
    %377 = vmatprep.subr.mxu0 %v334
    %378 = vmatpush1.msra.mxu0 %v333
    %379 = vmatprep.subr.mxu0 %v336
    %380 = vmatpush1.msra.mxu0 %v335
    %381 = vmatprep.subr.mxu0 %v338
    %382 = vmatpush1.msra.mxu0 %v337
    %383 = vmatprep.subr.mxu0 %v340
    %384 = vmatpush1.msra.mxu0 %v339
    %385 = vmatprep.subr.mxu0 %v342
    %386 = vmatpush1.msra.mxu0 %v341
    %387 = vmatprep.subr.mxu0 %v344
    %388 = vmatpush1.msra.mxu0 %v343
    %389 = vmatprep.subr.mxu0 %v346
    %390 = vmatpush1.msra.mxu0 %v345
    %391 = vmatprep.subr.mxu0 %v348
    %392 = vmatpush1.msra.mxu0 %v347
    %393 = vmatprep.subr.mxu0 %v350
    %394 = vmatpush1.msra.mxu0 %v349
    %395 = vmatprep.subr.mxu0 %v352
    %396 = vmatpush1.msra.mxu0 %v351
    %397 = vmatprep.subr.mxu0 %v354
    %398 = vmatpush1.msra.mxu0 %v353
    %399 = vmatprep.subr.mxu0 %v356
    %400 = vmatpush1.msra.mxu0 %v355
    %401 = vmatprep.subr.mxu0 %v358
    %402 = vmatpush1.msra.mxu0 %v357
    %403 = vmatprep.subr.mxu0 %v360
    %404 = vmatpush1.msra.mxu0 %v359
    %405 = vmatprep.subr.mxu0 %v362
    %406 = vmatpush1.msra.mxu0 %v361
    %407 = vmatprep.subr.mxu0 %v364
    %408 = vmatpush1.msra.mxu0 %v363
    %409 = vmatprep.subr.mxu0 0.0
    %410 = vmatpush1.msra.mxu0 0.0
    %411 = vmatprep.subr.mxu0 0.0
    %412 = vmatpush1.msra.mxu0 0.0
    %413 = vmatprep.subr.mxu0 0.0
    %414 = vmatpush1.msra.mxu0 0.0
    %415 = vmatprep.subr.mxu0 0.0
    %416 = vmatpush1.msra.mxu0 0.0
    %417 = vmatprep.subr.mxu0 0.0
    %418 = vmatpush1.msra.mxu0 0.0
    %419 = vmatprep.subr.mxu0 0.0
    %420 = vmatpush1.msra.mxu0 0.0
    %421 = vmatprep.subr.mxu0 0.0
    %422 = vmatpush1.msra.mxu0 0.0
    %423 = vmatprep.subr.mxu0 0.0
    %424 = vmatpush1.msra.mxu0 0.0
    %425 = vmatprep.subr.mxu0 0.0
    %426 = vmatpush1.msra.mxu0 0.0
    %427 = vmatprep.subr.mxu0 0.0
    %428 = vmatpush1.msra.mxu0 0.0
    %429 = vmatprep.subr.mxu0 0.0
    %430 = vmatpush1.msra.mxu0 0.0
    %431 = vmatprep.subr.mxu0 0.0
    %432 = vmatpush1.msra.mxu0 0.0
    %433 = vmatprep.subr.mxu0 0.0
    %434 = vmatpush1.msra.mxu0 0.0
    %435 = vmatprep.subr.mxu0 0.0
    %436 = vmatpush1.msra.mxu0 0.0
    %437 = vmatprep.subr.mxu0 0.0
    %438 = vmatpush1.msra.mxu0 0.0
    %439 = vmatprep.subr.mxu0 0.0
    %440 = vmatpush1.msra.mxu0 0.0
    %441 = vmatprep.mubr.f32.mxu0 0.0
    %442 = vmatmul.mubr.f32.gmra.mrb[0].mxu0 %v332
    %v443 = vpop.f32.mrb[0].mxu0
    %v444 = vadd.f32 %v370, %v443
    %v445 = vpop.f32.mrb[0].mxu0
    %v446 = vadd.f32 %v374, %v445
    %447 = vdwg.mxu0
    %vm448 = vcmp.ge.f32.partialorder %v444, 0.0
    %vm449 = vcmp.ge.f32.partialorder %v446, 0.0
    %v450 = vmul.f32 %v444, 0.01
    %v451 = vmul.f32 %v446, 0.01
    %v452 = vsel %vm448, %v444, %v450
    %v453 = vsel %vm449, %v446, %v451
    %v454 = vld [vmem:[%s9] sm:$0xff]
    %v455 = vld [vmem:[%s9 + $0x8] sm:$0xff]
    %v456 = vld [vmem:[%s9 + $0x10] sm:$0xff]
    %v457 = vld [vmem:[%s9 + $0x18] sm:$0xff]
    %v458 = vld [vmem:[%s9 + $0x20] sm:$0xff]
    %v459 = vld [vmem:[%s9 + $0x28] sm:$0xff]
    %v460 = vld [vmem:[%s9 + $0x30] sm:$0xff]
    %v461 = vld [vmem:[%s9 + $0x38] sm:$0xff]
    %v462 = vld [vmem:[%s9 + $0x40] sm:$0xff]
    %v463 = vld [vmem:[%s9 + $0x48] sm:$0xff]
    %v464 = vld [vmem:[%s9 + $0x50] sm:$0xff]
    %v465 = vld [vmem:[%s9 + $0x58] sm:$0xff]
    %v466 = vld [vmem:[%s9 + $0x60] sm:$0xff]
    %v467 = vld [vmem:[%s9 + $0x68] sm:$0xff]
    %v468 = vld [vmem:[%s9 + $0x70] sm:$0xff]
    %v469 = vld [vmem:[%s9 + $0x78] sm:$0xff]
    %v470 = vld [vmem:[%s9 + $0x80] sm:$0xff]
    %v471 = vld [vmem:[%s9 + $0x88] sm:$0xff]
    %v472 = vld [vmem:[%s9 + $0x90] sm:$0xff]
    %v473 = vld [vmem:[%s9 + $0x98] sm:$0xff]
    %v474 = vld [vmem:[%s9 + $0xa0] sm:$0xff]
    %v475 = vld [vmem:[%s9 + $0xa8] sm:$0xff]
    %v476 = vld [vmem:[%s9 + $0xb0] sm:$0xff]
    %v477 = vld [vmem:[%s9 + $0xb8] sm:$0xff]
    %v478 = vld [vmem:[%s9 + $0xc0] sm:$0xff]
    %v479 = vld [vmem:[%s9 + $0xc8] sm:$0xff]
    %v480 = vld [vmem:[%s9 + $0xd0] sm:$0xff]
    %v481 = vld [vmem:[%s9 + $0xd8] sm:$0xff]
    %v482 = vld [vmem:[%s9 + $0xe0] sm:$0xff]
    %v483 = vld [vmem:[%s9 + $0xe8] sm:$0xff]
    %v484 = vld [vmem:[%s9 + $0xf0] sm:$0xff]
    %v485 = vld [vmem:[%s9 + $0xf8] sm:$0xff]
    %v486 = vld [vmem:[%s10] sm:$0x1]
    %v488 = vlaneseq
    %v489 = vshrl.u32 %v488, 7
    %v490 = vsub.s32 0, %v489
    %v491 = vrot.slane %v486, %v490
    %493 = vmatprep.subr.mxu0 0.0
    %494 = vmatpush1.msra.mxu0 %v454
    %495 = vmatprep.subr.mxu0 0.0
    %496 = vmatpush1.msra.mxu0 %v455
    %497 = vmatprep.subr.mxu0 0.0
    %498 = vmatpush1.msra.mxu0 %v456
    %499 = vmatprep.subr.mxu0 0.0
    %500 = vmatpush1.msra.mxu0 %v457
    %501 = vmatprep.subr.mxu0 0.0
    %502 = vmatpush1.msra.mxu0 %v458
    %503 = vmatprep.subr.mxu0 0.0
    %504 = vmatpush1.msra.mxu0 %v459
    %505 = vmatprep.subr.mxu0 0.0
    %506 = vmatpush1.msra.mxu0 %v460
    %507 = vmatprep.subr.mxu0 0.0
    %508 = vmatpush1.msra.mxu0 %v461
    %509 = vmatprep.subr.mxu0 0.0
    %510 = vmatpush1.msra.mxu0 %v462
    %511 = vmatprep.subr.mxu0 0.0
    %512 = vmatpush1.msra.mxu0 %v463
    %513 = vmatprep.subr.mxu0 0.0
    %514 = vmatpush1.msra.mxu0 %v464
    %515 = vmatprep.subr.mxu0 0.0
    %516 = vmatpush1.msra.mxu0 %v465
    %517 = vmatprep.subr.mxu0 0.0
    %518 = vmatpush1.msra.mxu0 %v466
    %519 = vmatprep.subr.mxu0 0.0
    %520 = vmatpush1.msra.mxu0 %v467
    %521 = vmatprep.subr.mxu0 0.0
    %522 = vmatpush1.msra.mxu0 %v468
    %523 = vmatprep.subr.mxu0 0.0
    %524 = vmatpush1.msra.mxu0 %v469
    %525 = vmatprep.subr.mxu0 0.0
    %526 = vmatpush1.msra.mxu0 %v470
    %527 = vmatprep.subr.mxu0 0.0
    %528 = vmatpush1.msra.mxu0 %v471
    %529 = vmatprep.subr.mxu0 0.0
    %530 = vmatpush1.msra.mxu0 %v472
    %531 = vmatprep.subr.mxu0 0.0
    %532 = vmatpush1.msra.mxu0 %v473
    %533 = vmatprep.subr.mxu0 0.0
    %534 = vmatpush1.msra.mxu0 %v474
    %535 = vmatprep.subr.mxu0 0.0
    %536 = vmatpush1.msra.mxu0 %v475
    %537 = vmatprep.subr.mxu0 0.0
    %538 = vmatpush1.msra.mxu0 %v476
    %539 = vmatprep.subr.mxu0 0.0
    %540 = vmatpush1.msra.mxu0 %v477
    %541 = vmatprep.subr.mxu0 0.0
    %542 = vmatpush1.msra.mxu0 %v478
    %543 = vmatprep.subr.mxu0 0.0
    %544 = vmatpush1.msra.mxu0 %v479
    %545 = vmatprep.subr.mxu0 0.0
    %546 = vmatpush1.msra.mxu0 %v480
    %547 = vmatprep.subr.mxu0 0.0
    %548 = vmatpush1.msra.mxu0 %v481
    %549 = vmatprep.subr.mxu0 0.0
    %550 = vmatpush1.msra.mxu0 %v482
    %551 = vmatprep.subr.mxu0 0.0
    %552 = vmatpush1.msra.mxu0 %v483
    %553 = vmatprep.subr.mxu0 0.0
    %554 = vmatpush1.msra.mxu0 %v484
    %555 = vmatprep.subr.mxu0 0.0
    %556 = vmatpush1.msra.mxu0 %v485
    %557 = vmatprep.mubr.f32.mxu0 %v453
    %558 = vmatmul.mubr.f32.gmra.mrb[0].mxu0 %v452
    %v559 = vpop.f32.mrb[0].mxu0
    %v560 = vadd.f32 %v491, %v559
    %v561 = vpop.f32.mrb[0].mxu0
    %562 = vdwg.mxu0
    %vm563 = vcmp.ge.f32.partialorder %v560, 0.0
    %v564 = vmul.f32 %v560, 0.01
    %v565 = vsel %vm563, %v560, %v564
    %vm566 = vcmask 15360
    %567 = vst.msk [vmem:[%s11] sm:$0xff] %vm566, %v565
    // Predicated region
    $region58: #{tpu_custom_call.1} parent=1 // pred_check
      _
    $region59: #{tpu_custom_call.1} parent=1 // pred_check_branch
      %569 = sbr.rel (0) target = $region61
    $region60: #{tpu_custom_call.1} parent=1 // pred_region
      _
    $region61: #{tpu_custom_call.1} parent=1 // pred_fallthru
      _
    // Predicated region
    $region62: #{tpu_custom_call.1} parent=1 // pred_check
      _
    $region63: #{tpu_custom_call.1} parent=1 // pred_check_branch
      %571 = sbr.rel (0) target = $region65
    $region64: #{tpu_custom_call.1} parent=1 // pred_region
      _
    $region65: #{tpu_custom_call.1} parent=1 // pred_fallthru
      _
    %572 = vsyncpa [#allocation3], 1
    %573 = vsyncpa [#allocation5], 1

</llo_original>
